<compile_context>
chip_gen: v6e
topology: v6e:2x2x1
jax: 0.10.0
libtpu: 0.0.40
codegen_flags: <defaults>
</compile_context>

<pallas_src>
import functools

import jax
import jax.numpy as jnp
from jax import lax
from jax.experimental import pallas as pl
from jax.experimental.pallas import tpu as pltpu


def _pgat_kernel(q_hbm, k_ref, mask_ref, out_ref, q_sc, q_sem, *,
                 fuse_out_softmax):
    c = pl.program_id(1)
    n_c = pl.num_programs(1)

    # First column step (per core): bring the grid-invariant q projection into VMEM
    # exactly once (single buffer; avoids BlockSpec double-buffering a constant
    # block) and zero the resident h_prime accumulator (= the output block itself).
    @pl.when(c == 0)
    def _():
        cp = pltpu.make_async_copy(q_hbm, q_sc, q_sem)
        cp.start()
        cp.wait()
        out_ref[...] = jnp.zeros_like(out_ref)

    k_t = k_ref[...]                                         # (B, tc, f_p) bf16

    # scores tile: bmm(q, k_tile^T) -> (B, N, tc), f32 accumulation on the MXU.
    s = lax.dot_general(q_sc[...], k_t, (((2,), (2,)), ((0,), (0,))),
                        preferred_element_type=jnp.float32)

    # F.softmax(scores): legacy implicit dim=0 (batch axis), full B is in-block.
    s = s - jnp.max(s, axis=0, keepdims=True)
    e = jnp.exp(s)
    s = e * pl.reciprocal(jnp.sum(e, axis=0, keepdims=True), approx=True)

    # Mask with precomputed (adj + I) > 0 (int8 -> f32 compare), then
    # F.softmax(dim=1) over the full query/node axis.  Exact divide: this softmax
    # directly weights k in h_prime.
    keep = mask_ref[...].astype(jnp.float32)
    att = jnp.where(keep > 0, s, -9.0e15)
    att = att - jnp.max(att, axis=1, keepdims=True)
    e = jnp.exp(att)
    att = e / jnp.sum(e, axis=1, keepdims=True)
    # nn.Dropout: eval-mode identity.
    # TODO(synk): on v6e/v7x this masked softmax could run in bf16 (bf16 VPU/EUP)
    # to relieve vst/EUP pressure; kept f32 for parity (v5e has no bf16 VPU path).

    # h_prime partial: attention[:, :, tile] @ k[tile]   ((A @ x) @ Wk == A @ k).
    out_ref[...] += lax.dot_general(att.astype(jnp.bfloat16), k_t,
                                    (((2,), (1,)), ((0,), (0,))),
                                    preferred_element_type=jnp.float32)

    if fuse_out_softmax:
        # Single-core path: finish out = F.softmax(h_prime, dim=1) in-kernel.
        @pl.when(c == n_c - 1)
        def _():
            h = out_ref[...]
            h = h - jnp.max(h, axis=1, keepdims=True)
            e2 = jnp.exp(h)
            out_ref[...] = e2 / jnp.sum(e2, axis=1, keepdims=True)


def _vmem_capacity_bytes():
    """Per-TensorCore VMEM capacity; conservative 64 MiB (v7x) fallback."""
    try:
        info = pltpu.get_tpu_info()
        for attr in ("vmem_capacity_bytes", "vmem_bytes", "vmem_size_bytes"):
            v = getattr(info, attr, None)
            if v:
                return int(v)
    except Exception:
        pass
    return 64 * 1024 * 1024


def _num_tensorcores():
    """Best-effort TensorCores-per-chip query (v7x: 2).  Safe fallback: 1."""
    try:
        info = pltpu.get_tpu_info()
        for attr in ("tensorcores_per_chip", "num_tensorcores",
                     "cores_per_chip", "num_cores"):
            v = getattr(info, attr, None)
            if v:
                return max(1, int(v))
    except Exception:
        pass
    return 1


def _pick_col_tile(B, N, f_p, budget_bytes):
    """Column (key-node) tile width.  Batch and query axes stay whole in-block
    (softmax dim=0 / dim=1 need them); only the key axis is tiled."""
    if N % 128 != 0:
        # Lane-dim block must equal the full dim when it is not 128-aligned.
        # TODO(synk): pad N (zero node rows + masked adj) for very large
        # non-128-multiple N, where a full (B, N, N) score tile would not fit.
        return N
    # Resident: q (bf16, single copy) + output/accumulator block (f32, 2 buffers).
    resident = B * N * f_p * 2 + 2 * B * N * f_p * 4
    avail = max(budget_bytes - resident, 2 * 1024 * 1024)
    # Per column of tc: 2x int8 mask rows, 2x bf16 k rows, ~5 f32 score/softmax temps.
    bytes_per_col = B * (2 * N + 4 * f_p + 20 * N)
    tc = (avail // bytes_per_col) // 128 * 128
    tc = int(max(128, min(N, tc)))
    while N % tc:
        tc -= 128
    # With an int8 mask, keep each strided-DMA row chunk >= 512 B where possible.
    if N % 512 == 0:
        tc = max(tc, 512)
    return tc


def pgat_forward(inputs, adj, wq, wk, *, num_cores=None):
    inputs = inputs.astype(jnp.float32)
    B, N, f_in = inputs.shape
    f_out = wq.shape[1]

    # Lane-dense tiles / 128-wide MXU contraction: pad F_out to a multiple of 128.
    # Zero Wq/Wk columns -> zero q/k/h_prime columns, sliced off below.
    f_p = ((f_out + 127) // 128) * 128
    wq_p = wq.astype(jnp.float32)
    wk_p = wk.astype(jnp.float32)
    if f_p != f_out:
        wq_p = jnp.pad(wq_p, ((0, 0), (0, f_p - f_out)))
        wk_p = jnp.pad(wk_p, ((0, 0), (0, f_p - f_out)))

    # Hoisted projections: plain XLA matmuls at full MXU efficiency, bf16 into kernel.
    q = jnp.einsum("bnf,fo->bno", inputs, wq_p).astype(jnp.bfloat16)  # (B, N, f_p)
    k = jnp.einsum("bnf,fo->bno", inputs, wk_p).astype(jnp.bfloat16)  # (B, N, f_p)

    # Precomputed mask = (adj + I) > 0, streamed as int8 (4x less HBM/VMEM than f32).
    adj_f = adj.astype(jnp.float32)
    mask = ((adj_f + jnp.eye(N, dtype=jnp.float32)[None]) > 0).astype(jnp.int8)

    # Generation-aware VMEM sizing (v5e/v6e: 128 MiB physical, v7x: 64 MiB per TC).
    cap = _vmem_capacity_bytes()
    vmem_limit = int(max(32 * 1024 * 1024, min(int(cap * 0.85), 112 * 1024 * 1024)))
    tc = _pick_col_tile(B, N, f_p, int(vmem_limit * 0.8))
    n_blocks = N // tc

    # v7x: split the key-axis reduction across both TensorCores ("parallel" axis).
    cores = num_cores if num_cores is not None else _num_tensorcores()
    split = 2 if (cores >= 2 and n_blocks >= 2 and n_blocks % 2 == 0) else 1
    bpc = n_blocks // split
    fuse = (split == 1)   # final softmax fused in-kernel only on the 1-core path

    kernel = functools.partial(_pgat_kernel, fuse_out_softmax=fuse)

    cost = pl.CostEstimate(
        flops=int(4 * B * N * N * f_p),
        transcendentals=int(2 * B * N * N),
        bytes_accessed=int(q.size * 2 + k.size * 2 + mask.size
                           + split * B * N * f_p * 4),
    )

    partials = pl.pallas_call(
        kernel,
        out_shape=jax.ShapeDtypeStruct((split, B, N, f_p), jnp.float32),
        grid_spec=pltpu.PrefetchScalarGridSpec(
            num_scalar_prefetch=0,
            grid=(split, bpc),
            in_specs=[
                pl.BlockSpec(memory_space=pl.ANY),                    # q (HBM; copied once)
                pl.BlockSpec((B, tc, f_p),
                             lambda p, c: (0, p * bpc + c, 0)),       # k column tile (bf16)
                pl.BlockSpec((B, N, tc),
                             lambda p, c: (0, 0, p * bpc + c)),       # mask column tile (int8)
            ],
            out_specs=pl.BlockSpec((None, B, N, f_p),
                                   lambda p, c: (p, 0, 0, 0)),        # per-core partial h'
            scratch_shapes=[
                pltpu.VMEM((B, N, f_p), jnp.bfloat16),                # resident q (1 copy)
                pltpu.SemaphoreType.DMA,                              # q copy semaphore
            ],
        ),
        compiler_params=pltpu.CompilerParams(
            dimension_semantics=("parallel", "arbitrary"),
            vmem_limit_bytes=vmem_limit,
        ),
        cost_estimate=cost,
    )(q, k, mask)

    if fuse:
        # Kernel already applied the final dim=1 softmax; drop padded F_out columns.
        return partials[0][..., :f_out]
    # 2-core path: sum per-core partials, then the (tiny) final dim=1 softmax in XLA.
    h = partials.sum(axis=0)[..., :f_out]
    return jax.nn.softmax(h, axis=1)


def _pgat_reference(x, adj, wq, wk):
    """Pure-JAX reference matching the PyTorch forward (f32 throughout)."""
    q = jnp.einsum("bnf,fo->bno", x, wq)
    k = jnp.einsum("bnf,fo->bno", x, wk)
    s = jax.nn.softmax(jnp.einsum("bqo,bko->bqk", q, k), axis=0)
    adj_i = adj + jnp.eye(adj.shape[1], dtype=adj.dtype)[None]
    att = jax.nn.softmax(jnp.where(adj_i > 0, s, -9.0e15), axis=1)
    h = jnp.einsum("bqk,bkf->bqf", att, x)
    h = jnp.einsum("bqf,fo->bqo", h, wk)
    return jax.nn.softmax(h, axis=1)


if __name__ == "__main__":
    B, N, F_IN, F_OUT = 2, 8, 16, 32
    INIT_UNIFORM_MAG = 0.1   # stand-in for config.init_uniform_mag
    ALPHA = 0.2              # unused in forward (leakyrelu/relu never called)

    key = jax.random.PRNGKey(0)
    kx, ka, kq, kk, kl = jax.random.split(key, 5)

    x = jax.random.normal(kx, (B, N, F_IN), dtype=jnp.float32)
    adj = (jax.random.uniform(ka, (B, N, N)) > 0.5).astype(jnp.float32)

    # Deterministic parameter init matching nn.Parameter(...).uniform_(-mag, mag)
    Wq = jax.random.uniform(kq, (F_IN, F_OUT), jnp.float32,
                            -INIT_UNIFORM_MAG, INIT_UNIFORM_MAG)
    Wk = jax.random.uniform(kk, (F_IN, F_OUT), jnp.float32,
                            -INIT_UNIFORM_MAG, INIT_UNIFORM_MAG)
    Wl = jax.random.uniform(kl, (F_IN, F_OUT), jnp.float32,
                            -INIT_UNIFORM_MAG, INIT_UNIFORM_MAG)  # unused in forward

    out = jax.jit(pgat_forward)(x, adj, Wq, Wk)
    out = jax.block_until_ready(out)
    ref = _pgat_reference(x, adj, Wq, Wk)

    assert out.shape == (B, N, F_OUT)
    assert bool(jnp.all(jnp.isfinite(out)))
    # Each (b, :, f) column is a softmax over the node axis -> sums to 1.
    assert bool(jnp.allclose(out.sum(axis=1), 1.0, atol=1e-4))
    # bf16 q/k + approx reciprocal on the dim=0 softmax -> loose tolerance.
    assert bool(jnp.allclose(out, ref, atol=1e-2, rtol=1e-2))

    print("KERNEL_OK")
</pallas_src>

<mosaic_0001>
module attributes {stable_mosaic.version = 11 : i64} {
  func.func @_pgat_kernel(%arg0: i32, %arg1: i32, %arg2: memref<2x8x128xbf16, #tpu.memory_space<any>>, %arg3: memref<2x8x128xbf16, #tpu.memory_space<vmem>>, %arg4: memref<2x8x8xi8, #tpu.memory_space<vmem>>, %arg5: memref<1x2x8x128xf32, #tpu.memory_space<vmem>>, %arg6: memref<2x8x128xbf16, #tpu.memory_space<vmem>>, %arg7: memref<!tpu.dma_semaphore, #tpu.memory_space<semaphore_mem>>) attributes {dimension_semantics = [#tpu.dimension_semantics<parallel>, #tpu.dimension_semantics<arbitrary>], iteration_bounds = array<i64: 1, 1>, scalar_prefetch = 0 : i64, scratch_operands = 2 : i64, tpu.core_type = #tpu.core_type<tc>, window_params = [{}, {transform_indices = @transform_1, window_bounds = array<i64: 2, 8, 128>}, {transform_indices = @transform_2, window_bounds = array<i64: 2, 8, 8>}, {transform_indices = @transform_3, window_bounds = array<i64: 1, 2, 8, 128>}]} {
    %c0_i32 = arith.constant 0 : i32
    %0 = arith.cmpi eq, %arg1, %c0_i32 : i32
    %1 = arith.extui %0 : i1 to i32
    %c0_i32_0 = arith.constant 0 : i32
    %2 = arith.cmpi ne, %1, %c0_i32_0 : i32
    scf.if %2 {
      tpu.enqueue_dma source(%arg2 : memref<2x8x128xbf16, #tpu.memory_space<any>>) target(%arg6 : memref<2x8x128xbf16, #tpu.memory_space<vmem>>) target_semaphore(%arg7 : memref<!tpu.dma_semaphore, #tpu.memory_space<semaphore_mem>>)
      tpu.wait_dma2 semaphore(%arg7 : memref<!tpu.dma_semaphore, #tpu.memory_space<semaphore_mem>>) src(%arg2 : memref<2x8x128xbf16, #tpu.memory_space<any>>) dst(%arg6 : memref<2x8x128xbf16, #tpu.memory_space<vmem>>)
      %cst_26 = arith.constant 0.000000e+00 : f32
      %42 = vector.broadcast %cst_26 : f32 to vector<2x8x128xf32>
      %c0_27 = arith.constant 0 : index
      %c0_28 = arith.constant 0 : index
      %c0_29 = arith.constant 0 : index
      %c0_30 = arith.constant 0 : index
      %43 = vector.load %arg5[%c0_27, %c0_28, %c0_29, %c0_30] : memref<1x2x8x128xf32, #tpu.memory_space<vmem>>, vector<1x2x8x128xf32>
      %44 = vector.shape_cast %43 : vector<1x2x8x128xf32> to vector<2x8x128xf32>
      %45 = vector.shape_cast %42 : vector<2x8x128xf32> to vector<1x2x8x128xf32>
      tpu.vector_store %arg5[%c0_27, %c0_28, %c0_29, %c0_30], %45 {strides = array<i32>} : memref<1x2x8x128xf32, #tpu.memory_space<vmem>>, vector<1x2x8x128xf32>,
    } else {
    }
    %c0 = arith.constant 0 : index
    %c0_1 = arith.constant 0 : index
    %c0_2 = arith.constant 0 : index
    %3 = vector.load %arg3[%c0, %c0_1, %c0_2] : memref<2x8x128xbf16, #tpu.memory_space<vmem>>, vector<2x8x128xbf16>
    %c0_3 = arith.constant 0 : index
    %c0_4 = arith.constant 0 : index
    %c0_5 = arith.constant 0 : index
    %4 = vector.load %arg6[%c0_3, %c0_4, %c0_5] : memref<2x8x128xbf16, #tpu.memory_space<vmem>>, vector<2x8x128xbf16>
    %cst = arith.constant dense<0.000000e+00> : vector<2x8x8xf32>
    %5 = tpu.matmul %4, %3, %cst {dimension_numbers = #tpu.dot_dimension_numbers<[2], [2], [1], [1], [0, 0, 0, 1, 1, 1], [0], [0]>} : vector<2x8x128xbf16>, vector<2x8x128xbf16>, vector<2x8x8xf32> -> vector<2x8x8xf32>
    %cst_6 = arith.constant dense<0xFF800000> : vector<8x8xf32>
    %6 = vector.multi_reduction <maximumf>, %5, %cst_6 [0] : vector<2x8x8xf32> to vector<8x8xf32>
    %7 = vector.shape_cast %6 : vector<8x8xf32> to vector<1x8x8xf32>
    %8 = vector.broadcast %7 : vector<1x8x8xf32> to vector<2x8x8xf32>
    %9 = arith.subf %5, %8 : vector<2x8x8xf32>
    %10 = math.exp %9 : vector<2x8x8xf32>
    %cst_7 = arith.constant dense<0.000000e+00> : vector<8x8xf32>
    %11 = vector.multi_reduction <add>, %10, %cst_7 [0] : vector<2x8x8xf32> to vector<8x8xf32>
    %12 = vector.shape_cast %11 : vector<8x8xf32> to vector<1x8x8xf32>
    %13 = tpu.reciprocal %12 {approx = true} : vector<1x8x8xf32> -> vector<1x8x8xf32>
    %14 = vector.broadcast %13 : vector<1x8x8xf32> to vector<2x8x8xf32>
    %15 = arith.mulf %10, %14 : vector<2x8x8xf32>
    %c0_8 = arith.constant 0 : index
    %c0_9 = arith.constant 0 : index
    %c0_10 = arith.constant 0 : index
    %16 = vector.load %arg4[%c0_8, %c0_9, %c0_10] : memref<2x8x8xi8, #tpu.memory_space<vmem>>, vector<2x8x8xi8>
    %17 = arith.sitofp %16 : vector<2x8x8xi8> to vector<2x8x8xf32>
    %cst_11 = arith.constant 0.000000e+00 : f32
    %18 = vector.broadcast %cst_11 : f32 to vector<2x8x8xf32>
    %19 = arith.cmpf ogt, %17, %18 : vector<2x8x8xf32>
    %cst_12 = arith.constant -9.000000e+15 : f32
    %20 = vector.broadcast %cst_12 : f32 to vector<2x8x8xf32>
    %21 = arith.select %19, %15, %20 : vector<2x8x8xi1>, vector<2x8x8xf32>
    %cst_13 = arith.constant dense<0xFF800000> : vector<2x8xf32>
    %22 = vector.multi_reduction <maximumf>, %21, %cst_13 [1] : vector<2x8x8xf32> to vector<2x8xf32>
    %23 = vector.shape_cast %22 : vector<2x8xf32> to vector<2x1x8xf32>
    %24 = vector.broadcast %23 : vector<2x1x8xf32> to vector<2x8x8xf32>
    %25 = arith.subf %21, %24 : vector<2x8x8xf32>
    %26 = math.exp %25 : vector<2x8x8xf32>
    %cst_14 = arith.constant dense<0.000000e+00> : vector<2x8xf32>
    %27 = vector.multi_reduction <add>, %26, %cst_14 [1] : vector<2x8x8xf32> to vector<2x8xf32>
    %28 = vector.shape_cast %27 : vector<2x8xf32> to vector<2x1x8xf32>
    %29 = vector.broadcast %28 : vector<2x1x8xf32> to vector<2x8x8xf32>
    %30 = arith.divf %26, %29 : vector<2x8x8xf32>
    %c0_15 = arith.constant 0 : index
    %c0_16 = arith.constant 0 : index
    %c0_17 = arith.constant 0 : index
    %c0_18 = arith.constant 0 : index
    %31 = vector.load %arg5[%c0_15, %c0_16, %c0_17, %c0_18] : memref<1x2x8x128xf32, #tpu.memory_space<vmem>>, vector<1x2x8x128xf32>
    %32 = vector.shape_cast %31 : vector<1x2x8x128xf32> to vector<2x8x128xf32>
    %33 = arith.truncf %30 : vector<2x8x8xf32> to vector<2x8x8xbf16>
    %cst_19 = arith.constant dense<0.000000e+00> : vector<2x8x128xf32>
    %34 = tpu.matmul %33, %3, %cst_19 {dimension_numbers = #tpu.dot_dimension_numbers<[2], [1], [1], [2], [0, 0, 0, 1, 1, 2], [0], [0]>} : vector<2x8x8xbf16>, vector<2x8x128xbf16>, vector<2x8x128xf32> -> vector<2x8x128xf32>
    %35 = arith.addf %32, %34 : vector<2x8x128xf32>
    %c0_20 = arith.constant 0 : index
    %c0_21 = arith.constant 0 : index
    %c0_22 = arith.constant 0 : index
    %c0_23 = arith.constant 0 : index
    %36 = vector.load %arg5[%c0_20, %c0_21, %c0_22, %c0_23] : memref<1x2x8x128xf32, #tpu.memory_space<vmem>>, vector<1x2x8x128xf32>
    %37 = vector.shape_cast %36 : vector<1x2x8x128xf32> to vector<2x8x128xf32>
    %38 = vector.shape_cast %35 : vector<2x8x128xf32> to vector<1x2x8x128xf32>
    tpu.vector_store %arg5[%c0_20, %c0_21, %c0_22, %c0_23], %38 {strides = array<i32>} : memref<1x2x8x128xf32, #tpu.memory_space<vmem>>, vector<1x2x8x128xf32>,
    %c0_i32_24 = arith.constant 0 : i32
    %39 = arith.cmpi eq, %arg1, %c0_i32_24 : i32
    %40 = arith.extui %39 : i1 to i32
    %c0_i32_25 = arith.constant 0 : i32
    %41 = arith.cmpi ne, %40, %c0_i32_25 : i32
    scf.if %41 {
      %c0_26 = arith.constant 0 : index
      %c0_27 = arith.constant 0 : index
      %c0_28 = arith.constant 0 : index
      %c0_29 = arith.constant 0 : index
      %42 = vector.load %arg5[%c0_26, %c0_27, %c0_28, %c0_29] : memref<1x2x8x128xf32, #tpu.memory_space<vmem>>, vector<1x2x8x128xf32>
      %43 = vector.shape_cast %42 : vector<1x2x8x128xf32> to vector<2x8x128xf32>
      %cst_30 = arith.constant dense<0xFF800000> : vector<2x128xf32>
      %44 = vector.multi_reduction <maximumf>, %43, %cst_30 [1] : vector<2x8x128xf32> to vector<2x128xf32>
      %45 = vector.shape_cast %44 : vector<2x128xf32> to vector<2x1x128xf32>
      %46 = vector.broadcast %45 : vector<2x1x128xf32> to vector<2x8x128xf32>
      %47 = arith.subf %43, %46 : vector<2x8x128xf32>
      %48 = math.exp %47 : vector<2x8x128xf32>
      %cst_31 = arith.constant dense<0.000000e+00> : vector<2x128xf32>
      %49 = vector.multi_reduction <add>, %48, %cst_31 [1] : vector<2x8x128xf32> to vector<2x128xf32>
      %50 = vector.shape_cast %49 : vector<2x128xf32> to vector<2x1x128xf32>
      %51 = vector.broadcast %50 : vector<2x1x128xf32> to vector<2x8x128xf32>
      %52 = arith.divf %48, %51 : vector<2x8x128xf32>
      %c0_32 = arith.constant 0 : index
      %c0_33 = arith.constant 0 : index
      %c0_34 = arith.constant 0 : index
      %c0_35 = arith.constant 0 : index
      %53 = vector.load %arg5[%c0_32, %c0_33, %c0_34, %c0_35] : memref<1x2x8x128xf32, #tpu.memory_space<vmem>>, vector<1x2x8x128xf32>
      %54 = vector.shape_cast %53 : vector<1x2x8x128xf32> to vector<2x8x128xf32>
      %55 = vector.shape_cast %52 : vector<2x8x128xf32> to vector<1x2x8x128xf32>
      tpu.vector_store %arg5[%c0_32, %c0_33, %c0_34, %c0_35], %55 {strides = array<i32>} : memref<1x2x8x128xf32, #tpu.memory_space<vmem>>, vector<1x2x8x128xf32>,
    } else {
    }
    return
  }
  func.func @transform_1(%arg0: i32, %arg1: i32) -> (i32, i32, i32) {
    %c1_i32 = arith.constant 1 : i32
    %0 = arith.muli %arg0, %c1_i32 : i32
    %1 = arith.addi %0, %arg1 : i32
    %c0_i32 = arith.constant 0 : i32
    %c0_i32_0 = arith.constant 0 : i32
    %c0_i32_1 = arith.constant 0 : i32
    return %c0_i32, %1, %c0_i32_0 : i32, i32, i32
  }
  func.func @transform_2(%arg0: i32, %arg1: i32) -> (i32, i32, i32) {
    %c1_i32 = arith.constant 1 : i32
    %0 = arith.muli %arg0, %c1_i32 : i32
    %1 = arith.addi %0, %arg1 : i32
    %c0_i32 = arith.constant 0 : i32
    %c0_i32_0 = arith.constant 0 : i32
    %c0_i32_1 = arith.constant 0 : i32
    return %c0_i32, %c0_i32_0, %1 : i32, i32, i32
  }
  func.func @transform_3(%arg0: i32, %arg1: i32) -> (i32, i32, i32, i32) {
    %c0_i32 = arith.constant 0 : i32
    %c0_i32_0 = arith.constant 0 : i32
    %c0_i32_1 = arith.constant 0 : i32
    %c0_i32_2 = arith.constant 0 : i32
    return %arg0, %c0_i32, %c0_i32_0, %c0_i32_1 : i32, i32, i32, i32
  }
}

</mosaic_0001>

<llo_original>
// kernel: pgat_forward.1
$region0: #{pgat_forward.1}
  #allocation0 [shape = 'u32[]', space=smem, size = 0x4, offset = 0x4, fixed_abs, tag = 'smem constant byte address 0x4 - core index']
  #allocation1 [shape = 'u32[144,128]{1,0:T(1,128)}', space=vmem, size = 0x12000, scoped, tag = 'internal scratch']
  #allocation2 [shape = 'bf16[2,8,128]{2,1,0:T(8,128)(2,1)}', space=vmem, size = 0x1000, scoped, tag = 'scratch operand']
  #allocation3 [shape = 's32[1]{0}', space=sflag, size = 0x4, scoped, tag = 'scratch operand']
  #allocation6 [shape = 's32[]', space=sflag, size = 0x4, offset = 0, fixed_abs, tag = 'sflag constant byte address 0x0 - dummy sync flag']
  %s0 = inlined_call_operand.vmem [shape: bf16[2,8,128], index: 0, kind: input, shape index: {}]
  %s1 = inlined_call_operand.vmem [shape: bf16[2,8,128], index: 1, kind: input, shape index: {}]
  %s2 = inlined_call_operand.vmem [shape: s8[2,8,8], index: 2, kind: input, shape index: {}]
  %s3 = inlined_call_operand.hbm [shape: f32[1,2,8,128], index: 3, kind: output, shape index: {}]
  %s4 = sld [smem:[#allocation0]]
  $region60: #{pgat_forward.1} parent=0
    _
  %s6 = ssub.s32 1, %s4
  %s7 = scalar_select 0, %s6, %s4
  $region1: #{pgat_forward.1} parent=0
    #allocation4 [shape = 'u8[8192]{0}', space=vmem, size = 0x2000, scoped, tag = 'output window, operand 0, single buffered']
    #allocation5 [shape = 's32[1]{0}', space=sflag, size = 0x4, scoped, tag = 'scoped memory for pgat_forward.1']
    %8 = vsyncpa [#allocation5], 0
    // Predicated region
    $region2: #{pgat_forward.1} parent=1 // pred_check
      _
    $region3: #{pgat_forward.1} parent=1 // pred_check_branch
      %10 = sbr.rel (0) target = $region5
    $region4: #{pgat_forward.1} parent=1 // pred_region
      %s11 = sadd.s32 0, 0
      %p12 = scmp.lt.s32.totalorder %s11, 0
      %s13 = scalar_select %p12, %s11, 0
      %s14 = smul.addr %s13, 4
      %s15 = scalar_lea.vmem %s1, %s14
      %s16 = sadd.s32 0, 0
    $region5: #{pgat_forward.1} parent=1 // pred_fallthru
      _
    // Predicated region
    $region6: #{pgat_forward.1} parent=1 // pred_check
      _
    $region7: #{pgat_forward.1} parent=1 // pred_check_branch
      %18 = sbr.rel (0) target = $region9
    $region8: #{pgat_forward.1} parent=1 // pred_region
      %s19 = sadd.s32 0, 0
      %p20 = scmp.lt.s32.totalorder %s19, 0
      %s21 = scalar_select %p20, %s19, 0
      %s22 = smul.addr %s21, 2
      %s23 = scalar_lea.vmem %s2, %s22
      %s24 = sadd.s32 0, 0
    $region9: #{pgat_forward.1} parent=1 // pred_fallthru
      _
    %s25 = sadd.s32 0, 0
    %p26 = scmp.lt.s32.totalorder %s25, 0
    %s27 = scalar_select %p26, %s25, 0
    %s28 = smul.addr %s27, 4
    %s29 = scalar_lea.vmem %s1, %s28
    %s30 = sadd.s32 0, 0
    %p31 = scmp.lt.s32.totalorder %s30, 0
    %s32 = scalar_select %p31, %s30, 0
    %s33 = smul.addr %s32, 2
    %s34 = scalar_lea.vmem %s2, %s33
    %s35 = sadd.s32 0, 0
    %p36 = scmp.lt.s32.totalorder %s35, 0
    %s37 = scalar_select %p36, %s35, 0
    %s38 = smul.addr %s37, 4
    %s39 = scalar_lea.vmem %s1, %s38
    %s40 = sadd.s32 0, 0
    %s41 = sadd.s32 0, 0
    %p42 = scmp.lt.s32.totalorder %s41, 0
    %s43 = scalar_select %p42, %s41, 0
    %s44 = smul.addr %s43, 2
    %s45 = scalar_lea.vmem %s2, %s44
    %s46 = sadd.s32 0, 0
    %p48 = scmp.eq.s32.totalorder 0, 0
    // Predicated region
    $region10: #{pgat_forward.1} parent=1 // pred_check
      %p49 = pneg %p48
    $region11: #{pgat_forward.1} parent=1 // pred_check_branch
      %51 = sbr.rel (%p49) target = $region13
    $region12: #{pgat_forward.1} parent=1 // pred_region
      %p53 = scmp.lt.u32.totalorder 8, 8
      %p54 = pneg %p53
      // Predicated region
      $region14: #{pgat_forward.1} parent=12 // pred_check
        _
      $region15: #{pgat_forward.1} parent=12 // pred_check_branch
        %56 = sbr.rel (%p53) target = $region17
      $region16: #{pgat_forward.1} parent=12 // pred_region
        %s72 = sand.u32 8, 7
        %p73 = scmp.eq.s32.totalorder %s72, 0
        // Predicated region
        $region29: #{pgat_forward.1} parent=16 // pred_check
          %p74 = pneg %p73
        $region30: #{pgat_forward.1} parent=16 // pred_check_branch
          %76 = sbr.rel (%p74) target = $region32
        $region31: #{pgat_forward.1} parent=16 // pred_region
          loop: start=0, step=1, limit=1
          $region33: #{pgat_forward.1} parent=31 // loop_pre_header
            _
          $region34: #{pgat_forward.1} parent=31 // loop_header
            %s78 = sphi 0, %s82
            %p79 = scmp.ge.s32.totalorder %s78, 1
            %s83 = sphi %s0, %s0
            %s84 = sphi [#allocation2], [#allocation2]
          $region35: #{pgat_forward.1} parent=31 // loop_header_branch
            %81 = sbr.rel (%p79) target = $region39
          $region36: #{pgat_forward.1} parent=31 // loop_body
            %v85 = vld [vmem:[%s83] sm:$0xff]
            %86 = vst [vmem:[%s84] sm:$0xff] %v85
          $region37: #{pgat_forward.1} parent=31 // loop_footer
            %s82 = sadd.s32 1, %s78
          $region38: #{pgat_forward.1} parent=31 // loop_footer_branch
            %77 = sbr.rel target = $region34
          $region39: #{pgat_forward.1} parent=31 // loop_exit
            _
        $region32: #{pgat_forward.1} parent=16 // pred_fallthru
          _
        %p87 = pneg %p73
        // Predicated region
        $region40: #{pgat_forward.1} parent=16 // pred_check
          _
        $region41: #{pgat_forward.1} parent=16 // pred_check_branch
          %89 = sbr.rel (%p73) target = $region43
        $region42: #{pgat_forward.1} parent=16 // pred_region
          %s90 = sand.u32 8, 7
        $region43: #{pgat_forward.1} parent=16 // pred_fallthru
          _
      $region17: #{pgat_forward.1} parent=12 // pred_fallthru
        _
      // Predicated region
      $region18: #{pgat_forward.1} parent=12 // pred_check
        %p57 = pneg %p53
      $region19: #{pgat_forward.1} parent=12 // pred_check_branch
        %59 = sbr.rel (%p57) target = $region21
      $region20: #{pgat_forward.1} parent=12 // pred_region
        %s60 = sshll.u32 1, 8
        %s61 = ssub.s32 %s60, 1
        loop: start=0, step=1, limit=1
        $region22: #{pgat_forward.1} parent=20 // loop_pre_header
          _
        $region23: #{pgat_forward.1} parent=20 // loop_header
          %s63 = sphi 0, %s67
          %p64 = scmp.ge.s32.totalorder %s63, 1
          %s68 = sphi %s0, %s0
          %s69 = sphi [#allocation2], [#allocation2]
        $region24: #{pgat_forward.1} parent=20 // loop_header_branch
          %66 = sbr.rel (%p64) target = $region28
        $region25: #{pgat_forward.1} parent=20 // loop_body
          %v70 = vld [vmem:[%s68] sm:%s61]
          %71 = vst [vmem:[%s69] sm:%s61] %v70
        $region26: #{pgat_forward.1} parent=20 // loop_footer
          %s67 = sadd.s32 1, %s63
        $region27: #{pgat_forward.1} parent=20 // loop_footer_branch
          %62 = sbr.rel target = $region23
        $region28: #{pgat_forward.1} parent=20 // loop_exit
          _
      $region21: #{pgat_forward.1} parent=12 // pred_fallthru
        _
      // Predicated region
      $region44: #{pgat_forward.1} parent=12 // pred_check
        _
      $region45: #{pgat_forward.1} parent=12 // pred_check_branch
        %93 = sbr.rel (0) target = $region47
      $region46: #{pgat_forward.1} parent=12 // pred_region
        %94 = vsyncadd [#allocation3], 128
      $region47: #{pgat_forward.1} parent=12 // pred_fallthru
        _
      %s95 = smul.u32 4, 2
      %s96 = smul.u32 %s95, 1
      %s97 = smul.u32 %s96, 1
      %s98 = sshll.u32 %s97, 4
      %99 = dma.done [#allocation3], %s98
      %100 = vst [vmem:[#allocation4] sm:$0xff] 0.0
      %101 = vst [vmem:[#allocation4 + $0x8] sm:$0xff] 0.0
    $region13: #{pgat_forward.1} parent=1 // pred_fallthru
      _
    %v102 = vld [vmem:[%s39] sm:$0xf]
    %v103 = vld [vmem:[%s39 + $0x4] sm:$0xf]
    %v104 = vld [vmem:[#allocation2] sm:$0xf]
    %v105 = vld [vmem:[#allocation2 + $0x4] sm:$0xf]
    %106 = vmatprep.subr.bf16.mxu0 0
    %107 = vmatpush1.bf16.xpose.msra.mxu0 0
    %108 = vmatprep.subr.bf16.mxu0 0
    %109 = vmatpush1.bf16.xpose.msra.mxu0 0
    %110 = vmatprep.subr.bf16.mxu0 0
    %111 = vmatpush1.bf16.xpose.msra.mxu0 0
    %112 = vmatprep.subr.bf16.mxu0 0
    %113 = vmatpush1.bf16.xpose.msra.mxu0 0
    %114 = vmatprep.subr.bf16.mxu0 0
    %115 = vmatpush1.bf16.xpose.msra.mxu0 0
    %116 = vmatprep.subr.bf16.mxu0 0
    %117 = vmatpush1.bf16.xpose.msra.mxu0 0
    %118 = vmatprep.subr.bf16.mxu0 0
    %119 = vmatpush1.bf16.xpose.msra.mxu0 0
    %120 = vmatprep.subr.bf16.mxu0 0
    %121 = vmatpush1.bf16.xpose.msra.mxu0 %v102
    %122 = vmatprep.subr.bf16.mxu0 0
    %123 = vmatpush2.bf16.xpose.msra.mxu0 0
    %124 = vmatprep.subr.bf16.mxu0 0
    %125 = vmatpush2.bf16.xpose.msra.mxu0 0
    %126 = vmatprep.subr.bf16.mxu0 0
    %127 = vmatpush2.bf16.xpose.msra.mxu0 0
    %128 = vmatprep.subr.bf16.mxu0 0
    %129 = vmatpush2.bf16.xpose.msra.mxu0 0
    %130 = vmatprep.subr.bf16.mxu0 0
    %131 = vmatpush2.bf16.xpose.msra.mxu0 0
    %132 = vmatprep.subr.bf16.mxu0 0
    %133 = vmatpush2.bf16.xpose.msra.mxu0 0
    %134 = vmatprep.subr.bf16.mxu0 0
    %135 = vmatpush2.bf16.xpose.msra.mxu0 0
    %136 = vmatprep.subr.bf16.mxu0 0
    %137 = vmatpush2.bf16.xpose.msra.mxu0 0
    %138 = vmatprep.mubr.bf16.mxu0 0
    %139 = vmatmul.mubr.bf16.gmra.mxu0 %v104
    %v140 = vpop.f32.mrf.mxu0
    %v141 = vadd.f32 0.0, %v140
    %v142 = vpop.f32.mrf.mxu0
    %v143 = vpop.f32.mrf.mxu0
    %v144 = vpop.f32.mrf.mxu0
    %145 = vdwg.mxu0
    %146 = vmatprep.subr.bf16.mxu0 0
    %147 = vmatpush1.bf16.xpose.msra.mxu0 0
    %148 = vmatprep.subr.bf16.mxu0 0
    %149 = vmatpush1.bf16.xpose.msra.mxu0 0
    %150 = vmatprep.subr.bf16.mxu0 0
    %151 = vmatpush1.bf16.xpose.msra.mxu0 0
    %152 = vmatprep.subr.bf16.mxu0 0
    %153 = vmatpush1.bf16.xpose.msra.mxu0 0
    %154 = vmatprep.subr.bf16.mxu0 0
    %155 = vmatpush1.bf16.xpose.msra.mxu0 0
    %156 = vmatprep.subr.bf16.mxu0 0
    %157 = vmatpush1.bf16.xpose.msra.mxu0 0
    %158 = vmatprep.subr.bf16.mxu0 0
    %159 = vmatpush1.bf16.xpose.msra.mxu0 0
    %160 = vmatprep.subr.bf16.mxu0 0
    %161 = vmatpush1.bf16.xpose.msra.mxu0 %v103
    %162 = vmatprep.subr.bf16.mxu0 0
    %163 = vmatpush2.bf16.xpose.msra.mxu0 0
    %164 = vmatprep.subr.bf16.mxu0 0
    %165 = vmatpush2.bf16.xpose.msra.mxu0 0
    %166 = vmatprep.subr.bf16.mxu0 0
    %167 = vmatpush2.bf16.xpose.msra.mxu0 0
    %168 = vmatprep.subr.bf16.mxu0 0
    %169 = vmatpush2.bf16.xpose.msra.mxu0 0
    %170 = vmatprep.subr.bf16.mxu0 0
    %171 = vmatpush2.bf16.xpose.msra.mxu0 0
    %172 = vmatprep.subr.bf16.mxu0 0
    %173 = vmatpush2.bf16.xpose.msra.mxu0 0
    %174 = vmatprep.subr.bf16.mxu0 0
    %175 = vmatpush2.bf16.xpose.msra.mxu0 0
    %176 = vmatprep.subr.bf16.mxu0 0
    %177 = vmatpush2.bf16.xpose.msra.mxu0 0
    %178 = vmatprep.mubr.bf16.mxu0 0
    %179 = vmatmul.mubr.bf16.gmra.mxu0 %v105
    %v180 = vpop.f32.mrf.mxu0
    %v181 = vadd.f32 0.0, %v180
    %v182 = vpop.f32.mrf.mxu0
    %v183 = vpop.f32.mrf.mxu0
    %v184 = vpop.f32.mrf.mxu0
    %185 = vdwg.mxu0
    %vm186 = vcmask 64512
    %v187 = vsel %vm186, %v141, -inf
    %v188 = vsel %vm186, %v181, -inf
    %v189 = vmax.f32 %v187, %v188
    %v190 = vsub.f32 %v141, %v189
    %v191 = vsub.f32 %v181, %v189
    %v192 = vmul.f32 %v190, 1.442695
    %v193 = vpow.pop %v192
    %v194 = vmul.f32 %v191, 1.442695
    %v195 = vpow.pop %v194
    %v196 = vsel %vm186, %v193, 0.0
    %v197 = vsel %vm186, %v195, 0.0
    %v198 = vadd.f32 %v196, %v197
    %v199 = vrcp.pop %v198
    %v200 = vmul.f32 %v193, %v199
    %v201 = vmul.f32 %v195, %v199
    %v202 = vld [vmem:[%s45] sm:$0x3]
    %v203 = vld [vmem:[%s45 + $0x2] sm:$0x3]
    %v204 = vunpack.c.0.s8 %v202
    %v205 = vunpack.c.0.s8 %v203
    %v206 = vcvt.s32.f32 %v204
    %v207 = vcvt.s32.f32 %v205
    %vm208 = vcmp.gt.f32.partialorder %v206, 0.0
    %vm209 = vcmp.gt.f32.partialorder %v207, 0.0
    %v210 = vsel %vm208, %v200, -9e+15
    %v211 = vsel %vm209, %v201, -9e+15
    %v212 = vsel %vm186, %v210, -inf
    %v213 = vrot.slane %v212, 4
    %v214 = vmax.f32 %v212, %v213
    %v215 = vrot.slane %v214, 2
    %v216 = vmax.f32 %v214, %v215
    %v217 = vrot.slane %v216, 1
    %v218 = vmax.f32 %v216, %v217
    %v219 = vsel %vm186, %v211, -inf
    %v220 = vrot.slane %v219, 4
    %v221 = vmax.f32 %v219, %v220
    %v222 = vrot.slane %v221, 2
    %v223 = vmax.f32 %v221, %v222
    %v224 = vrot.slane %v223, 1
    %v225 = vmax.f32 %v223, %v224
    %v226 = vsub.f32 %v210, %v218
    %v227 = vsub.f32 %v211, %v225
    %v228 = vmul.f32 %v226, 1.442695
    %v229 = vpow.pop %v228
    %v230 = vmul.f32 %v227, 1.442695
    %v231 = vpow.pop %v230
    %v232 = vsel %vm186, %v229, 0.0
    %v233 = vrot.slane %v232, 4
    %v234 = vadd.f32 %v232, %v233
    %v235 = vrot.slane %v234, 2
    %v236 = vadd.f32 %v234, %v235
    %v237 = vrot.slane %v236, 1
    %v238 = vadd.f32 %v236, %v237
    %v239 = vsel %vm186, %v231, 0.0
    %v240 = vrot.slane %v239, 4
    %v241 = vadd.f32 %v239, %v240
    %v242 = vrot.slane %v241, 2
    %v243 = vadd.f32 %v241, %v242
    %v244 = vrot.slane %v243, 1
    %v245 = vadd.f32 %v243, %v244
    %v246 = vrcp.pop %v238
    %v247 = vmul.f32 %v229, %v246
    %v248 = vrcp.pop %v245
    %v249 = vmul.f32 %v231, %v248
    %v250 = vld [vmem:[#allocation4] sm:$0xff]
    %v251 = vld [vmem:[#allocation4 + $0x8] sm:$0xff]
    %v252 = vpack.c.bf16 %v247, %v247
    %v253 = vpack.c.bf16 %v249, %v249
    %v255 = vsel %vm186, %v252, 0
    %vm257 = vcmask 1043456
    %v259 = vsel %vm257, %v102, 0
    %261 = vmatprep.subr.bf16.mxu0 0
    %262 = vmatpush1.bf16.msra.mxu0 0
    %263 = vmatprep.subr.bf16.mxu0 0
    %264 = vmatpush1.bf16.msra.mxu0 0
    %265 = vmatprep.subr.bf16.mxu0 0
    %266 = vmatpush1.bf16.msra.mxu0 0
    %267 = vmatprep.subr.bf16.mxu0 0
    %268 = vmatpush1.bf16.msra.mxu0 0
    %269 = vmatprep.subr.bf16.mxu0 0
    %270 = vmatpush1.bf16.msra.mxu0 0
    %271 = vmatprep.subr.bf16.mxu0 0
    %272 = vmatpush1.bf16.msra.mxu0 0
    %273 = vmatprep.subr.bf16.mxu0 0
    %274 = vmatpush1.bf16.msra.mxu0 0
    %275 = vmatprep.subr.bf16.mxu0 0
    %276 = vmatpush1.bf16.msra.mxu0 %v259
    %277 = vmatprep.subr.bf16.mxu0 0
    %278 = vmatpush2.bf16.msra.mxu0 0
    %279 = vmatprep.subr.bf16.mxu0 0
    %280 = vmatpush2.bf16.msra.mxu0 0
    %281 = vmatprep.subr.bf16.mxu0 0
    %282 = vmatpush2.bf16.msra.mxu0 0
    %283 = vmatprep.subr.bf16.mxu0 0
    %284 = vmatpush2.bf16.msra.mxu0 0
    %285 = vmatprep.subr.bf16.mxu0 0
    %286 = vmatpush2.bf16.msra.mxu0 0
    %287 = vmatprep.subr.bf16.mxu0 0
    %288 = vmatpush2.bf16.msra.mxu0 0
    %289 = vmatprep.subr.bf16.mxu0 0
    %290 = vmatpush2.bf16.msra.mxu0 0
    %291 = vmatprep.subr.bf16.mxu0 0
    %292 = vmatpush2.bf16.msra.mxu0 0
    %293 = vmatprep.mubr.bf16.mxu0 0
    %294 = vmatmul.mubr.bf16.gmra.mxu0 %v255
    %v295 = vpop.f32.mrf.mxu0
    %v296 = vadd.f32 0.0, %v295
    %v297 = vpop.f32.mrf.mxu0
    %v298 = vpop.f32.mrf.mxu0
    %v299 = vpop.f32.mrf.mxu0
    %300 = vdwg.mxu0
    %v302 = vsel %vm186, %v253, 0
    %v305 = vsel %vm257, %v103, 0
    %307 = vmatprep.subr.bf16.mxu0 0
    %308 = vmatpush1.bf16.msra.mxu0 0
    %309 = vmatprep.subr.bf16.mxu0 0
    %310 = vmatpush1.bf16.msra.mxu0 0
    %311 = vmatprep.subr.bf16.mxu0 0
    %312 = vmatpush1.bf16.msra.mxu0 0
    %313 = vmatprep.subr.bf16.mxu0 0
    %314 = vmatpush1.bf16.msra.mxu0 0
    %315 = vmatprep.subr.bf16.mxu0 0
    %316 = vmatpush1.bf16.msra.mxu0 0
    %317 = vmatprep.subr.bf16.mxu0 0
    %318 = vmatpush1.bf16.msra.mxu0 0
    %319 = vmatprep.subr.bf16.mxu0 0
    %320 = vmatpush1.bf16.msra.mxu0 0
    %321 = vmatprep.subr.bf16.mxu0 0
    %322 = vmatpush1.bf16.msra.mxu0 %v305
    %323 = vmatprep.subr.bf16.mxu0 0
    %324 = vmatpush2.bf16.msra.mxu0 0
    %325 = vmatprep.subr.bf16.mxu0 0
    %326 = vmatpush2.bf16.msra.mxu0 0
    %327 = vmatprep.subr.bf16.mxu0 0
    %328 = vmatpush2.bf16.msra.mxu0 0
    %329 = vmatprep.subr.bf16.mxu0 0
    %330 = vmatpush2.bf16.msra.mxu0 0
    %331 = vmatprep.subr.bf16.mxu0 0
    %332 = vmatpush2.bf16.msra.mxu0 0
    %333 = vmatprep.subr.bf16.mxu0 0
    %334 = vmatpush2.bf16.msra.mxu0 0
    %335 = vmatprep.subr.bf16.mxu0 0
    %336 = vmatpush2.bf16.msra.mxu0 0
    %337 = vmatprep.subr.bf16.mxu0 0
    %338 = vmatpush2.bf16.msra.mxu0 0
    %339 = vmatprep.mubr.bf16.mxu0 0
    %340 = vmatmul.mubr.bf16.gmra.mxu0 %v302
    %v341 = vpop.f32.mrf.mxu0
    %v342 = vadd.f32 0.0, %v341
    %v343 = vpop.f32.mrf.mxu0
    %v344 = vpop.f32.mrf.mxu0
    %v345 = vpop.f32.mrf.mxu0
    %346 = vdwg.mxu0
    %v347 = vadd.f32 %v250, %v296
    %v348 = vadd.f32 %v251, %v342
    %349 = vst [vmem:[#allocation4] sm:$0xff] %v347
    %350 = vst [vmem:[#allocation4 + $0x8] sm:$0xff] %v348
    // Predicated region
    $region48: #{pgat_forward.1} parent=1 // pred_check
      %p351 = pneg %p48
    $region49: #{pgat_forward.1} parent=1 // pred_check_branch
      %353 = sbr.rel (%p351) target = $region51
    $region50: #{pgat_forward.1} parent=1 // pred_region
      %v354 = vld [vmem:[#allocation4] sm:$0xff]
      %v355 = vld [vmem:[#allocation4 + $0x8] sm:$0xff]
      %v356 = vrot.slane %v354, 4
      %v357 = vmax.f32 %v354, %v356
      %v358 = vrot.slane %v357, 2
      %v359 = vmax.f32 %v357, %v358
      %v360 = vrot.slane %v359, 1
      %v361 = vmax.f32 %v359, %v360
      %v362 = vrot.slane %v355, 4
      %v363 = vmax.f32 %v355, %v362
      %v364 = vrot.slane %v363, 2
      %v365 = vmax.f32 %v363, %v364
      %v366 = vrot.slane %v365, 1
      %v367 = vmax.f32 %v365, %v366
      %v368 = vsub.f32 %v354, %v361
      %v369 = vsub.f32 %v355, %v367
      %v370 = vmul.f32 %v368, 1.442695
      %v371 = vpow.pop %v370
      %v372 = vmul.f32 %v369, 1.442695
      %v373 = vpow.pop %v372
      %v374 = vrot.slane %v371, 4
      %v375 = vadd.f32 %v371, %v374
      %v376 = vrot.slane %v375, 2
      %v377 = vadd.f32 %v375, %v376
      %v378 = vrot.slane %v377, 1
      %v379 = vadd.f32 %v377, %v378
      %v380 = vrot.slane %v373, 4
      %v381 = vadd.f32 %v373, %v380
      %v382 = vrot.slane %v381, 2
      %v383 = vadd.f32 %v381, %v382
      %v384 = vrot.slane %v383, 1
      %v385 = vadd.f32 %v383, %v384
      %v386 = vrcp.pop %v379
      %v387 = vmul.f32 %v371, %v386
      %v388 = vrcp.pop %v385
      %v389 = vmul.f32 %v373, %v388
      %390 = vst [vmem:[#allocation4] sm:$0xff] %v387
      %391 = vst [vmem:[#allocation4 + $0x8] sm:$0xff] %v389
    $region51: #{pgat_forward.1} parent=1 // pred_fallthru
      _
    // Predicated region
    $region52: #{pgat_forward.1} parent=1 // pred_check
      _
    $region53: #{pgat_forward.1} parent=1 // pred_check_branch
      %393 = sbr.rel (0) target = $region55
    $region54: #{pgat_forward.1} parent=1 // pred_region
      %s395 = ssub.s32 256, 256
      %396 = vsyncadd [#allocation5], %s395
      %s397 = sshll.u32 [#allocation4], 4
      %s398 = int_to_ptr.vmem [resolvable:$true] %s397
      %403 = dma.vmem_to_hbm [thread:$0]  %s398, 256, %s3, [#allocation5], 128, 128, 8
    $region55: #{pgat_forward.1} parent=1 // pred_fallthru
      _
    // Predicated region
    $region56: #{pgat_forward.1} parent=1 // pred_check
      _
    $region57: #{pgat_forward.1} parent=1 // pred_check_branch
      %405 = sbr.rel (0) target = $region59
    $region58: #{pgat_forward.1} parent=1 // pred_region
      %406 = dma.done [#allocation5], 256
    $region59: #{pgat_forward.1} parent=1 // pred_fallthru
      _
    %407 = vsyncpa [#allocation5], 1
  %408 = vsyncmov [#allocation3]
  %s409 = vpop.sfrf %408
  %p410 = scmp.eq.s32.totalorder %s409, 0
  %p411 = pneg %p410
  %413 = shalt.err (%p411)

</llo_original>
